<compile_context>
chip_gen: v5e
topology: v5e:2x2
jax: 0.10.0
libtpu: 0.0.40
codegen_flags: <defaults>
</compile_context>

<pallas_src>
import jax
import jax.numpy as jnp
from jax.experimental import pallas as pl
from jax.experimental.pallas import tpu as pltpu

LANE = 128          # TPU lane width
H_PAD = 32          # hidden dim 30 padded to 32 (row 30 = bias carry, 31 = 0)
IN_ROWS = 5         # 4 input features + 1 ones row (bias carrier)
W3_ROWS = 8         # row 0 is the real output row (8 keeps MXU M-dim aligned)
OUT_ROWS = 1        # only the real output row is written back to HBM
CARRY = 20.0        # tanh(20.0) == 1.0 exactly in float32 -> carries the bias "1"


def _round_up(a, b):
    return ((a + b - 1) // b) * b


def narx_kernel(x_ref, w1_ref, w2_ref, w3_ref, o_ref):
    # x_ref:  [IN_ROWS, bm]   (features + ones row on sublanes, batch on lanes)
    # w1_ref: [H_PAD, IN_ROWS]   (W1 with b1 folded into the "ones" column)
    # w2_ref: [H_PAD, H_PAD]     (W2 with b2 folded + carry row)
    # w3_ref: [W3_ROWS, H_PAD]   (row 0 = W3 with b3 folded, rest zero)
    # o_ref:  [OUT_ROWS, bm]     (the real output row only)
    h = jnp.tanh(jnp.dot(w1_ref[...], x_ref[...],
                         preferred_element_type=jnp.float32))
    h = jnp.tanh(jnp.dot(w2_ref[...], h,
                         preferred_element_type=jnp.float32))
    y = jnp.dot(w3_ref[...], h, preferred_element_type=jnp.float32)
    o_ref[...] = y[:OUT_ROWS, :].astype(o_ref.dtype)


def pack_params(params):
    """Fold biases into padded weight matrices (PyTorch layout in: [out, in])."""
    w1, b1, w2, b2, w3, b3 = params
    f32 = jnp.float32
    w1a = (jnp.zeros((H_PAD, IN_ROWS), f32)
           .at[:30, :4].set(w1.astype(f32))
           .at[:30, 4].set(b1.astype(f32))
           .at[30, 4].set(CARRY))                      # row 30 -> tanh(20) = 1
    w2a = (jnp.zeros((H_PAD, H_PAD), f32)
           .at[:30, :30].set(w2.astype(f32))
           .at[:30, 30].set(b2.astype(f32))
           .at[30, 30].set(CARRY))                     # keep the carry alive
    w3a = (jnp.zeros((W3_ROWS, H_PAD), f32)
           .at[0, :30].set(w3[0].astype(f32))
           .at[0, 30].set(b3[0].astype(f32)))
    return w1a, w2a, w3a


def _plan_tiles(n, bm_max):
    """Choose a lane-aligned batch tile and padded batch size.

    Keeps the grid >= 2 steps when the batch allows it (v7x has 2 TCs fed by
    the parallel grid axis); costs nothing on v5e/v6e.
    """
    n128 = _round_up(n, LANE)
    min_blocks = 2 if n128 >= 2 * LANE else 1
    num_blocks = max(min_blocks, pl.cdiv(n128, bm_max))
    bm = _round_up(pl.cdiv(n128, num_blocks), LANE)
    n_pad = bm * num_blocks
    return bm, n_pad, num_blocks


def narx_forward(x, params, *, bm_max=32768, min_pallas_batch=256):
    """x: [batch, 4] float32.  Returns [batch, 1] float32."""
    n = x.shape[0]
    if n < min_pallas_batch:
        # Fixed pallas_call/grid setup cost exceeds the compute for tiny inputs.
        return narx_reference(x, params)

    bm, n_pad, num_blocks = _plan_tiles(n, bm_max)
    w1a, w2a, w3a = pack_params(params)

    # Batch on the lane axis: x_aug = [IN_ROWS, n_pad],
    # rows 0..3 = features, row 4 = 1.0 (bias carrier).
    x_aug = (jnp.zeros((IN_ROWS, n_pad), jnp.float32)
             .at[:4, :n].set(x.T.astype(jnp.float32))
             .at[4, :].set(1.0))

    param_bytes = 4 * (H_PAD * IN_ROWS + H_PAD * H_PAD + W3_ROWS * H_PAD)
    cost = pl.CostEstimate(
        flops=2 * (H_PAD * IN_ROWS + H_PAD * H_PAD + W3_ROWS * H_PAD) * n_pad,
        transcendentals=2 * H_PAD * n_pad,
        bytes_accessed=4 * (IN_ROWS + OUT_ROWS) * n_pad + param_bytes,
    )

    out_pad = pl.pallas_call(
        narx_kernel,
        out_shape=jax.ShapeDtypeStruct((OUT_ROWS, n_pad), jnp.float32),
        grid_spec=pltpu.PrefetchScalarGridSpec(
            num_scalar_prefetch=0,
            grid=(num_blocks,),
            in_specs=[
                pl.BlockSpec((IN_ROWS, bm), lambda i: (0, i)),       # x tile
                pl.BlockSpec((H_PAD, IN_ROWS), lambda i: (0, 0)),    # W1 + b1
                pl.BlockSpec((H_PAD, H_PAD), lambda i: (0, 0)),      # W2 + b2
                pl.BlockSpec((W3_ROWS, H_PAD), lambda i: (0, 0)),    # W3 + b3
            ],
            out_specs=pl.BlockSpec((OUT_ROWS, bm), lambda i: (0, i)),
        ),
        compiler_params=pltpu.CompilerParams(
            dimension_semantics=("parallel",),
        ),
        cost_estimate=cost,
    )(x_aug, w1a, w2a, w3a)

    # Row 0 of the lane-major output is the real result.
    return out_pad[0, :n].reshape(n, 1)


def init_params(key):
    """Deterministic init mimicking PyTorch nn.Linear default:
    U(-1/sqrt(fan_in), 1/sqrt(fan_in)); weights stored PyTorch-style [out, in]."""
    def linear(key, fan_in, fan_out):
        kw, kb = jax.random.split(key)
        bound = 1.0 / jnp.sqrt(jnp.float32(fan_in))
        w = jax.random.uniform(kw, (fan_out, fan_in), jnp.float32, -bound, bound)
        b = jax.random.uniform(kb, (fan_out,), jnp.float32, -bound, bound)
        return w, b

    k1, k2, k3 = jax.random.split(key, 3)
    w1, b1 = linear(k1, 4, 30)
    w2, b2 = linear(k2, 30, 30)
    w3, b3 = linear(k3, 30, 1)
    return (w1, b1, w2, b2, w3, b3)


def narx_reference(x, params):
    w1, b1, w2, b2, w3, b3 = params
    z = jnp.tanh(x @ w1.T + b1)
    z = jnp.tanh(z @ w2.T + b2)
    return z @ w3.T + b3


if __name__ == "__main__":
    key = jax.random.PRNGKey(0)
    kx, kp = jax.random.split(key)

    # Small but above the Pallas-dispatch threshold; not a multiple of 128 so
    # the padding / 2-step parallel tiling path is exercised (bm=256, grid=(2,)).
    batch = 300
    x = jax.random.normal(kx, (batch, 4), dtype=jnp.float32)
    params = init_params(kp)

    fwd = jax.jit(narx_forward)   # fuses the transpose/pad & output slice
    out = jax.block_until_ready(fwd(x, params))

    ref = narx_reference(x, params)
    assert out.shape == (batch, 1), out.shape
    assert jnp.allclose(out, ref, atol=3e-5, rtol=1e-5), (
        float(jnp.max(jnp.abs(out - ref)))
    )
    print("KERNEL_OK")
</pallas_src>

<mosaic_0001>
module attributes {stable_mosaic.version = 11 : i64} {
  func.func @narx_kernel(%arg0: i32, %arg1: memref<5x256xf32, #tpu.memory_space<vmem>>, %arg2: memref<32x5xf32, #tpu.memory_space<vmem>>, %arg3: memref<32x32xf32, #tpu.memory_space<vmem>>, %arg4: memref<8x32xf32, #tpu.memory_space<vmem>>, %arg5: memref<1x256xf32, #tpu.memory_space<vmem>>) attributes {dimension_semantics = [#tpu.dimension_semantics<parallel>], iteration_bounds = array<i64: 2>, scalar_prefetch = 0 : i64, scratch_operands = 0 : i64, tpu.core_type = #tpu.core_type<tc>, window_params = [{transform_indices = @transform_0, window_bounds = array<i64: 5, 256>}, {pipeline_mode = #tpu.pipeline_mode<synchronous>, transform_indices = @transform_1, window_bounds = array<i64: 32, 5>}, {pipeline_mode = #tpu.pipeline_mode<synchronous>, transform_indices = @transform_2, window_bounds = array<i64: 32, 32>}, {pipeline_mode = #tpu.pipeline_mode<synchronous>, transform_indices = @transform_3, window_bounds = array<i64: 8, 32>}, {transform_indices = @transform_4, window_bounds = array<i64: 1, 256>}]} {
    %c0 = arith.constant 0 : index
    %c0_0 = arith.constant 0 : index
    %0 = vector.load %arg2[%c0, %c0_0] : memref<32x5xf32, #tpu.memory_space<vmem>>, vector<32x5xf32>
    %c0_1 = arith.constant 0 : index
    %c0_2 = arith.constant 0 : index
    %1 = vector.load %arg1[%c0_1, %c0_2] : memref<5x256xf32, #tpu.memory_space<vmem>>, vector<5x256xf32>
    %cst = arith.constant dense<0.000000e+00> : vector<32x256xf32>
    %2 = tpu.matmul %0, %1, %cst {dimension_numbers = #tpu.dot_dimension_numbers<[1], [0], [0], [1], [0, 0, 1, 1], [], []>} : vector<32x5xf32>, vector<5x256xf32>, vector<32x256xf32> -> vector<32x256xf32>
    %3 = math.tanh %2 : vector<32x256xf32>
    %c0_3 = arith.constant 0 : index
    %c0_4 = arith.constant 0 : index
    %4 = vector.load %arg3[%c0_3, %c0_4] : memref<32x32xf32, #tpu.memory_space<vmem>>, vector<32x32xf32>
    %cst_5 = arith.constant dense<0.000000e+00> : vector<32x256xf32>
    %5 = tpu.matmul %4, %3, %cst_5 {dimension_numbers = #tpu.dot_dimension_numbers<[1], [0], [0], [1], [0, 0, 1, 1], [], []>} : vector<32x32xf32>, vector<32x256xf32>, vector<32x256xf32> -> vector<32x256xf32>
    %6 = math.tanh %5 : vector<32x256xf32>
    %c0_6 = arith.constant 0 : index
    %c0_7 = arith.constant 0 : index
    %7 = vector.load %arg4[%c0_6, %c0_7] : memref<8x32xf32, #tpu.memory_space<vmem>>, vector<8x32xf32>
    %cst_8 = arith.constant dense<0.000000e+00> : vector<8x256xf32>
    %8 = tpu.matmul %7, %6, %cst_8 {dimension_numbers = #tpu.dot_dimension_numbers<[1], [0], [0], [1], [0, 0, 1, 1], [], []>} : vector<8x32xf32>, vector<32x256xf32>, vector<8x256xf32> -> vector<8x256xf32>
    %9 = vector.extract_strided_slice %8 {offsets = [0, 0], sizes = [1, 256], strides = [1, 1]} : vector<8x256xf32> to vector<1x256xf32>
    %c0_9 = arith.constant 0 : index
    %c0_10 = arith.constant 0 : index
    %10 = vector.load %arg5[%c0_9, %c0_10] : memref<1x256xf32, #tpu.memory_space<vmem>>, vector<1x256xf32>
    tpu.vector_store %arg5[%c0_9, %c0_10], %9 {strides = array<i32>} : memref<1x256xf32, #tpu.memory_space<vmem>>, vector<1x256xf32>,
    return
  }
  func.func @transform_0(%arg0: i32) -> (i32, i32) {
    %c0_i32 = arith.constant 0 : i32
    %c0_i32_0 = arith.constant 0 : i32
    return %c0_i32, %arg0 : i32, i32
  }
  func.func @transform_1(%arg0: i32) -> (i32, i32) {
    %c0_i32 = arith.constant 0 : i32
    %c0_i32_0 = arith.constant 0 : i32
    %c0_i32_1 = arith.constant 0 : i32
    return %c0_i32, %c0_i32_0 : i32, i32
  }
  func.func @transform_2(%arg0: i32) -> (i32, i32) {
    %c0_i32 = arith.constant 0 : i32
    %c0_i32_0 = arith.constant 0 : i32
    %c0_i32_1 = arith.constant 0 : i32
    return %c0_i32, %c0_i32_0 : i32, i32
  }
  func.func @transform_3(%arg0: i32) -> (i32, i32) {
    %c0_i32 = arith.constant 0 : i32
    %c0_i32_0 = arith.constant 0 : i32
    %c0_i32_1 = arith.constant 0 : i32
    return %c0_i32, %c0_i32_0 : i32, i32
  }
  func.func @transform_4(%arg0: i32) -> (i32, i32) {
    %c0_i32 = arith.constant 0 : i32
    %c0_i32_0 = arith.constant 0 : i32
    return %c0_i32, %arg0 : i32, i32
  }
}

</mosaic_0001>

<llo_original>
// kernel: narx_forward.1
$region0: #{narx_forward.1}
  #allocation0 [shape = 'u32[]', space=smem, size = 0x4, offset = 0x4, fixed_abs, tag = 'smem constant byte address 0x4 - core index']
  #allocation1 [shape = 'u32[72,128]{1,0:T(1,128)}', space=vmem, size = 0x9000, scoped, tag = 'internal scratch']
  %s0 = inlined_call_operand.vmem [shape: f32[5,512], index: 0, kind: input, shape index: {}]
  %s1 = inlined_call_operand.vmem [shape: f32[32,5], index: 1, kind: input, shape index: {}]
  %s2 = inlined_call_operand.vmem [shape: f32[32,32], index: 2, kind: input, shape index: {}]
  %s3 = inlined_call_operand.vmem [shape: f32[8,32], index: 3, kind: input, shape index: {}]
  %s4 = inlined_call_operand.vmem [shape: f32[1,512], index: 4, kind: output, shape index: {}]
  %s5 = sld [smem:[#allocation0]]
  $region49: #{narx_forward.1} parent=0
    _
  %s7 = ssub.s32 1, %s5
  %s8 = scalar_select 0, %s7, %s5
  loop: start=0, step=1, limit=4
  $region2: #{narx_forward.1} parent=0 // loop_pre_header
    _
  $region3: #{narx_forward.1} parent=0 // loop_header
    %s10 = sphi 0, %s14
    %p11 = scmp.ge.s32.totalorder %s10, 4
    %s20 = sphi 0, %s22
    %s23 = sphi 0, %s20
    %s24 = sphi 0, %s23
    %s40 = sphi 0, %s24
    %s44 = sphi 0, %s44
    %s46 = sphi 0, %s44
    %s47 = sphi 0, %s46
    %s61 = sphi 0, %s47
    %s65 = sphi 0, %s65
    %s67 = sphi 0, %s65
    %s68 = sphi 0, %s67
    %s82 = sphi 0, %s68
    %s86 = sphi 0, %s86
    %s88 = sphi 0, %s86
    %s89 = sphi 0, %s88
    %s103 = sphi 0, %s89
    %s109 = sphi 0, %s111
    %s112 = sphi 0, %s109
    %s113 = sphi 0, %s112
    %s129 = sphi 0, %s113
  $region4: #{narx_forward.1} parent=0 // loop_header_branch
    %13 = sbr.rel (%p11) target = $region8
  $region5: #{narx_forward.1} parent=0 // loop_body
    %s15 = ssub.s32 %s10, 1
    %s16 = ssub.s32 %s10, 2
    %s17 = sadd.s32 %s10, 1
    %s18 = ssub.s32 %s10, %s17
    %p19 = scmp.eq.s32.totalorder %s18, 0
    %s21 = sadd.s32 %s20, 1
    %s22 = scalar_select %p19, %s20, %s21
    %p25 = pneg %p19
    %p26 = scmp.eq.s32.totalorder %s10, 1
    %p27 = por %p25, %p26
    %p28 = scmp.ne.s32.totalorder %s20, %s23
    %p29 = scmp.eq.s32.totalorder %s10, 0
    %p30 = por %p28, %p29
    %p31 = scmp.ne.s32.totalorder %s20, %s23
    %p32 = scmp.eq.s32.totalorder %s15, 1
    %p33 = por %p31, %p32
    %p34 = scmp.ne.s32.totalorder %s23, %s24
    %p35 = scmp.eq.s32.totalorder %s15, 0
    %p36 = por %p34, %p35
    %p37 = scmp.ne.s32.totalorder %s23, %s24
    %p38 = scmp.eq.s32.totalorder %s16, 1
    %p39 = por %p37, %p38
    %p41 = scmp.ne.s32.totalorder %s24, %s40
    %p42 = scmp.eq.s32.totalorder %s16, 0
    %p43 = por %p41, %p42
    %s45 = sadd.s32 %s44, 1
    %p48 = scmp.eq.s32.totalorder %s10, 1
    %p49 = scmp.ne.s32.totalorder %s44, %s46
    %p50 = scmp.eq.s32.totalorder %s10, 0
    %p51 = por %p49, %p50
    %p52 = scmp.ne.s32.totalorder %s44, %s46
    %p53 = scmp.eq.s32.totalorder %s15, 1
    %p54 = por %p52, %p53
    %p55 = scmp.ne.s32.totalorder %s46, %s47
    %p56 = scmp.eq.s32.totalorder %s15, 0
    %p57 = por %p55, %p56
    %p58 = scmp.ne.s32.totalorder %s46, %s47
    %p59 = scmp.eq.s32.totalorder %s16, 1
    %p60 = por %p58, %p59
    %p62 = scmp.ne.s32.totalorder %s47, %s61
    %p63 = scmp.eq.s32.totalorder %s16, 0
    %p64 = por %p62, %p63
    %s66 = sadd.s32 %s65, 1
    %p69 = scmp.eq.s32.totalorder %s10, 1
    %p70 = scmp.ne.s32.totalorder %s65, %s67
    %p71 = scmp.eq.s32.totalorder %s10, 0
    %p72 = por %p70, %p71
    %p73 = scmp.ne.s32.totalorder %s65, %s67
    %p74 = scmp.eq.s32.totalorder %s15, 1
    %p75 = por %p73, %p74
    %p76 = scmp.ne.s32.totalorder %s67, %s68
    %p77 = scmp.eq.s32.totalorder %s15, 0
    %p78 = por %p76, %p77
    %p79 = scmp.ne.s32.totalorder %s67, %s68
    %p80 = scmp.eq.s32.totalorder %s16, 1
    %p81 = por %p79, %p80
    %p83 = scmp.ne.s32.totalorder %s68, %s82
    %p84 = scmp.eq.s32.totalorder %s16, 0
    %p85 = por %p83, %p84
    %s87 = sadd.s32 %s86, 1
    %p90 = scmp.eq.s32.totalorder %s10, 1
    %p91 = scmp.ne.s32.totalorder %s86, %s88
    %p92 = scmp.eq.s32.totalorder %s10, 0
    %p93 = por %p91, %p92
    %p94 = scmp.ne.s32.totalorder %s86, %s88
    %p95 = scmp.eq.s32.totalorder %s15, 1
    %p96 = por %p94, %p95
    %p97 = scmp.ne.s32.totalorder %s88, %s89
    %p98 = scmp.eq.s32.totalorder %s15, 0
    %p99 = por %p97, %p98
    %p100 = scmp.ne.s32.totalorder %s88, %s89
    %p101 = scmp.eq.s32.totalorder %s16, 1
    %p102 = por %p100, %p101
    %p104 = scmp.ne.s32.totalorder %s89, %s103
    %p105 = scmp.eq.s32.totalorder %s16, 0
    %p106 = por %p104, %p105
    %s107 = ssub.s32 %s10, %s17
    %p108 = scmp.eq.s32.totalorder %s107, 0
    %s110 = sadd.s32 %s109, 1
    %s111 = scalar_select %p108, %s109, %s110
    %p114 = pneg %p108
    %p115 = scmp.eq.s32.totalorder %s10, 1
    %p116 = por %p114, %p115
    %p117 = scmp.ne.s32.totalorder %s109, %s112
    %p118 = scmp.eq.s32.totalorder %s10, 0
    %p119 = por %p117, %p118
    %p120 = scmp.ne.s32.totalorder %s109, %s112
    %p121 = scmp.eq.s32.totalorder %s15, 1
    %p122 = por %p120, %p121
    %p123 = scmp.ne.s32.totalorder %s112, %s113
    %p124 = scmp.eq.s32.totalorder %s15, 0
    %p125 = por %p123, %p124
    %p126 = scmp.ne.s32.totalorder %s112, %s113
    %p127 = scmp.eq.s32.totalorder %s16, 1
    %p128 = por %p126, %p127
    %p130 = scmp.ne.s32.totalorder %s113, %s129
    %p131 = scmp.eq.s32.totalorder %s16, 0
    %p132 = por %p130, %p131
    %p133 = scmp.le.s32.totalorder 1, %s10
    %p134 = scmp.lt.s32.totalorder %s10, 3
    %p135 = pnand %p133, %p134
    %p136 = pneg %p135
    // Predicated region
    $region9: #{narx_forward.1} parent=5 // pred_check
      _
    $region10: #{narx_forward.1} parent=5 // pred_check_branch
      %138 = sbr.rel (%p135) target = $region12
    $region11: #{narx_forward.1} parent=5 // pred_region
      %s139 = ssub.s32 %s10, 1
      // Predicated region
      $region13: #{narx_forward.1} parent=11 // pred_check
        %p140 = pneg %p57
      $region14: #{narx_forward.1} parent=11 // pred_check_branch
        %142 = sbr.rel (%p140) target = $region16
      $region15: #{narx_forward.1} parent=11 // pred_region
        _
      $region16: #{narx_forward.1} parent=11 // pred_fallthru
        _
      // Predicated region
      $region17: #{narx_forward.1} parent=11 // pred_check
        %p143 = pneg %p78
      $region18: #{narx_forward.1} parent=11 // pred_check_branch
        %145 = sbr.rel (%p143) target = $region20
      $region19: #{narx_forward.1} parent=11 // pred_region
        _
      $region20: #{narx_forward.1} parent=11 // pred_fallthru
        _
      // Predicated region
      $region21: #{narx_forward.1} parent=11 // pred_check
        %p146 = pneg %p99
      $region22: #{narx_forward.1} parent=11 // pred_check_branch
        %148 = sbr.rel (%p146) target = $region24
      $region23: #{narx_forward.1} parent=11 // pred_region
        _
      $region24: #{narx_forward.1} parent=11 // pred_fallthru
        _
    $region12: #{narx_forward.1} parent=5 // pred_fallthru
      _
    %p149 = scmp.lt.s32.totalorder %s10, 2
    // Predicated region
    $region25: #{narx_forward.1} parent=5 // pred_check
      %p150 = pneg %p149
    $region26: #{narx_forward.1} parent=5 // pred_check_branch
      %152 = sbr.rel (%p150) target = $region28
    $region27: #{narx_forward.1} parent=5 // pred_region
      // Predicated region
      $region29: #{narx_forward.1} parent=27 // pred_check
        %p153 = pneg %p30
      $region30: #{narx_forward.1} parent=27 // pred_check_branch
        %155 = sbr.rel (%p153) target = $region32
      $region31: #{narx_forward.1} parent=27 // pred_region
        %s156 = smul.u32 2, %s10
        %p157 = scmp.lt.s32.totalorder %s156, 3
        %s158 = scalar_select %p157, %s156, 3
        %s159 = smul.addr %s158, 8
        %s160 = scalar_lea.vmem %s0, %s159
        %s161 = smul.u32 2, %s10
      $region32: #{narx_forward.1} parent=27 // pred_fallthru
        _
    $region28: #{narx_forward.1} parent=5 // pred_fallthru
      _
    %p162 = scmp.le.s32.totalorder 1, %s10
    %p163 = scmp.lt.s32.totalorder %s10, 3
    %p164 = pnand %p162, %p163
    %p165 = pneg %p164
    // Predicated region
    $region33: #{narx_forward.1} parent=5 // pred_check
      _
    $region34: #{narx_forward.1} parent=5 // pred_check_branch
      %167 = sbr.rel (%p164) target = $region36
    $region35: #{narx_forward.1} parent=5 // pred_region
      %s168 = ssub.s32 %s10, 1
      %s169 = smul.u32 2, %s15
      %p170 = scmp.lt.s32.totalorder %s169, 3
      %s171 = scalar_select %p170, %s169, 3
      %s172 = smul.addr %s171, 8
      %s173 = scalar_lea.vmem %s0, %s172
      %p174 = pneg %p36
      %p175 = pneg %p33
      %p176 = pneg %p57
      %p177 = pneg %p54
      %p178 = pneg %p78
      %p179 = pneg %p75
      %p180 = pneg %p99
      %p181 = pneg %p96
      %p182 = pneg %p125
      %p183 = pneg %p122
      %s184 = smul.u32 2, %s15
      %p185 = scmp.lt.s32.totalorder %s184, 3
      %s186 = scalar_select %p185, %s184, 3
      %s187 = scalar_lea.vmem %s4, %s186
      %s188 = smul.u32 2, %s15
      %p189 = scmp.lt.s32.totalorder %s188, 3
      %s190 = scalar_select %p189, %s188, 3
      %s191 = smul.addr %s190, 8
      %s192 = scalar_lea.vmem %s0, %s191
      %s193 = smul.u32 2, %s15
      %s194 = smul.u32 2, %s15
      %p195 = scmp.lt.s32.totalorder %s194, 3
      %s196 = scalar_select %p195, %s194, 3
      %s197 = scalar_lea.vmem %s4, %s196
      %s198 = smul.u32 2, %s15
      %v199 = vld [vmem:[%s1] sm:$0xff]
      %v200 = vld [vmem:[%s1 + $0x8] sm:$0xff]
      %v201 = vld [vmem:[%s1 + $0x10] sm:$0xff]
      %v202 = vld [vmem:[%s1 + $0x18] sm:$0xff]
      %v203 = vld [vmem:[%s192] sm:$0x1f]
      %v204 = vld [vmem:[%s192 + $0x8] sm:$0x1f]
      %vm205 = vcmask 39936
      %v207 = vsel %vm205, %v199, 0
      %v210 = vsel %vm205, %v200, 0
      %v213 = vsel %vm205, %v201, 0
      %v216 = vsel %vm205, %v202, 0
      %vm218 = vcmask 1044480
      %v220 = vsel %vm218, %v203, 0
      %v223 = vsel %vm218, %v204, 0
      %225 = vmatpush.msra.mxu0 0.0
      %226 = vmatpush.msra.mxu0 0.0
      %227 = vmatpush.msra.mxu0 0.0
      %228 = vmatpush.msra.mxu0 0.0
      %229 = vmatpush.msra.mxu0 0.0
      %230 = vmatpush.msra.mxu0 0.0
      %231 = vmatpush.msra.mxu0 0.0
      %232 = vmatpush.msra.mxu0 0.0
      %233 = vmatpush.msra.mxu0 0.0
      %234 = vmatpush.msra.mxu0 0.0
      %235 = vmatpush.msra.mxu0 0.0
      %236 = vmatpush.msra.mxu0 0.0
      %237 = vmatpush.msra.mxu0 0.0
      %238 = vmatpush.msra.mxu0 0.0
      %239 = vmatpush.msra.mxu0 0.0
      %240 = vmatpush.msra.mxu0 %v220
      %241 = vmatmul.f32.gmra.mxu0 %v207
      %v242 = vpop.f32.mrf.mxu0
      %v243 = vadd.f32 0.0, %v242
      %244 = vmatmul.f32.gmra.mxu0 %v210
      %v245 = vpop.f32.mrf.mxu0
      %v246 = vadd.f32 0.0, %v245
      %247 = vmatmul.f32.gmra.mxu0 %v213
      %v248 = vpop.f32.mrf.mxu0
      %v249 = vadd.f32 0.0, %v248
      %250 = vmatmul.f32.gmra.mxu0 %v216
      %v251 = vpop.f32.mrf.mxu0
      %v252 = vadd.f32 0.0, %v251
      %253 = vdwg.mxu0
      %254 = vmatpush.msra.mxu0 0.0
      %255 = vmatpush.msra.mxu0 0.0
      %256 = vmatpush.msra.mxu0 0.0
      %257 = vmatpush.msra.mxu0 0.0
      %258 = vmatpush.msra.mxu0 0.0
      %259 = vmatpush.msra.mxu0 0.0
      %260 = vmatpush.msra.mxu0 0.0
      %261 = vmatpush.msra.mxu0 0.0
      %262 = vmatpush.msra.mxu0 0.0
      %263 = vmatpush.msra.mxu0 0.0
      %264 = vmatpush.msra.mxu0 0.0
      %265 = vmatpush.msra.mxu0 0.0
      %266 = vmatpush.msra.mxu0 0.0
      %267 = vmatpush.msra.mxu0 0.0
      %268 = vmatpush.msra.mxu0 0.0
      %269 = vmatpush.msra.mxu0 %v223
      %270 = vmatmul.f32.gmra.mxu0 %v207
      %v271 = vpop.f32.mrf.mxu0
      %v272 = vadd.f32 0.0, %v271
      %273 = vmatmul.f32.gmra.mxu0 %v210
      %v274 = vpop.f32.mrf.mxu0
      %v275 = vadd.f32 0.0, %v274
      %276 = vmatmul.f32.gmra.mxu0 %v213
      %v277 = vpop.f32.mrf.mxu0
      %v278 = vadd.f32 0.0, %v277
      %279 = vmatmul.f32.gmra.mxu0 %v216
      %v280 = vpop.f32.mrf.mxu0
      %v281 = vadd.f32 0.0, %v280
      %282 = vdwg.mxu0
      %v283 = vtanh.pop %v243
      %v284 = vtanh.pop %v272
      %v285 = vtanh.pop %v246
      %v286 = vtanh.pop %v275
      %v287 = vtanh.pop %v249
      %v288 = vtanh.pop %v278
      %v289 = vtanh.pop %v252
      %v290 = vtanh.pop %v281
      %v291 = vld [vmem:[%s2] sm:$0xff]
      %v292 = vld [vmem:[%s2 + $0x8] sm:$0xff]
      %v293 = vld [vmem:[%s2 + $0x10] sm:$0xff]
      %v294 = vld [vmem:[%s2 + $0x18] sm:$0xff]
      %vm295 = vcmask 261120
      %v297 = vsel %vm295, %v291, 0
      %v300 = vsel %vm295, %v292, 0
      %v303 = vsel %vm295, %v293, 0
      %v306 = vsel %vm295, %v294, 0
      %308 = vmatpush.msra.mxu0 0.0
      %309 = vmatpush.msra.mxu0 0.0
      %310 = vmatpush.msra.mxu0 0.0
      %311 = vmatpush.msra.mxu0 0.0
      %312 = vmatpush.msra.mxu0 0.0
      %313 = vmatpush.msra.mxu0 0.0
      %314 = vmatpush.msra.mxu0 0.0
      %315 = vmatpush.msra.mxu0 0.0
      %316 = vmatpush.msra.mxu0 0.0
      %317 = vmatpush.msra.mxu0 0.0
      %318 = vmatpush.msra.mxu0 0.0
      %319 = vmatpush.msra.mxu0 0.0
      %320 = vmatpush.msra.mxu0 %v289
      %321 = vmatpush.msra.mxu0 %v287
      %322 = vmatpush.msra.mxu0 %v285
      %323 = vmatpush.msra.mxu0 %v283
      %324 = vmatmul.f32.gmra.mxu0 %v297
      %v325 = vpop.f32.mrf.mxu0
      %v326 = vadd.f32 0.0, %v325
      %327 = vmatmul.f32.gmra.mxu0 %v300
      %v328 = vpop.f32.mrf.mxu0
      %v329 = vadd.f32 0.0, %v328
      %330 = vmatmul.f32.gmra.mxu0 %v303
      %v331 = vpop.f32.mrf.mxu0
      %v332 = vadd.f32 0.0, %v331
      %333 = vmatmul.f32.gmra.mxu0 %v306
      %v334 = vpop.f32.mrf.mxu0
      %v335 = vadd.f32 0.0, %v334
      %336 = vdwg.mxu0
      %337 = vmatpush.msra.mxu0 0.0
      %338 = vmatpush.msra.mxu0 0.0
      %339 = vmatpush.msra.mxu0 0.0
      %340 = vmatpush.msra.mxu0 0.0
      %341 = vmatpush.msra.mxu0 0.0
      %342 = vmatpush.msra.mxu0 0.0
      %343 = vmatpush.msra.mxu0 0.0
      %344 = vmatpush.msra.mxu0 0.0
      %345 = vmatpush.msra.mxu0 0.0
      %346 = vmatpush.msra.mxu0 0.0
      %347 = vmatpush.msra.mxu0 0.0
      %348 = vmatpush.msra.mxu0 0.0
      %349 = vmatpush.msra.mxu0 %v290
      %350 = vmatpush.msra.mxu0 %v288
      %351 = vmatpush.msra.mxu0 %v286
      %352 = vmatpush.msra.mxu0 %v284
      %353 = vmatmul.f32.gmra.mxu0 %v297
      %v354 = vpop.f32.mrf.mxu0
      %v355 = vadd.f32 0.0, %v354
      %356 = vmatmul.f32.gmra.mxu0 %v300
      %v357 = vpop.f32.mrf.mxu0
      %v358 = vadd.f32 0.0, %v357
      %359 = vmatmul.f32.gmra.mxu0 %v303
      %v360 = vpop.f32.mrf.mxu0
      %v361 = vadd.f32 0.0, %v360
      %362 = vmatmul.f32.gmra.mxu0 %v306
      %v363 = vpop.f32.mrf.mxu0
      %v364 = vadd.f32 0.0, %v363
      %365 = vdwg.mxu0
      %v366 = vtanh.pop %v326
      %v367 = vtanh.pop %v355
      %v368 = vtanh.pop %v329
      %v369 = vtanh.pop %v358
      %v370 = vtanh.pop %v332
      %v371 = vtanh.pop %v361
      %v372 = vtanh.pop %v335
      %v373 = vtanh.pop %v364
      %v374 = vld [vmem:[%s3] sm:$0xff]
      %v376 = vsel %vm295, %v374, 0
      %378 = vmatpush.msra.mxu0 0.0
      %379 = vmatpush.msra.mxu0 0.0
      %380 = vmatpush.msra.mxu0 0.0
      %381 = vmatpush.msra.mxu0 0.0
      %382 = vmatpush.msra.mxu0 0.0
      %383 = vmatpush.msra.mxu0 0.0
      %384 = vmatpush.msra.mxu0 0.0
      %385 = vmatpush.msra.mxu0 0.0
      %386 = vmatpush.msra.mxu0 0.0
      %387 = vmatpush.msra.mxu0 0.0
      %388 = vmatpush.msra.mxu0 0.0
      %389 = vmatpush.msra.mxu0 0.0
      %390 = vmatpush.msra.mxu0 %v372
      %391 = vmatpush.msra.mxu0 %v370
      %392 = vmatpush.msra.mxu0 %v368
      %393 = vmatpush.msra.mxu0 %v366
      %394 = vmatmul.f32.gmra.mxu0 %v376
      %v395 = vpop.f32.mrf.mxu0
      %v396 = vadd.f32 0.0, %v395
      %397 = vdwg.mxu0
      %398 = vmatpush.msra.mxu0 0.0
      %399 = vmatpush.msra.mxu0 0.0
      %400 = vmatpush.msra.mxu0 0.0
      %401 = vmatpush.msra.mxu0 0.0
      %402 = vmatpush.msra.mxu0 0.0
      %403 = vmatpush.msra.mxu0 0.0
      %404 = vmatpush.msra.mxu0 0.0
      %405 = vmatpush.msra.mxu0 0.0
      %406 = vmatpush.msra.mxu0 0.0
      %407 = vmatpush.msra.mxu0 0.0
      %408 = vmatpush.msra.mxu0 0.0
      %409 = vmatpush.msra.mxu0 0.0
      %410 = vmatpush.msra.mxu0 %v373
      %411 = vmatpush.msra.mxu0 %v371
      %412 = vmatpush.msra.mxu0 %v369
      %413 = vmatpush.msra.mxu0 %v367
      %414 = vmatmul.f32.gmra.mxu0 %v376
      %v415 = vpop.f32.mrf.mxu0
      %v416 = vadd.f32 0.0, %v415
      %417 = vdwg.mxu0
      %v420 = vrot.slane %v416, 7
      %vm421 = vcmask 1040384
      %v422 = vsel %vm421, %v396, %v420
      %v424 = vlaneseq
      %vm425 = vcmp.ge.s32.totalorder %v424, 0
      %vm426 = vcmp.lt.s32.totalorder %v424, 256
      %vm427 = vmand %vm425, %vm426
      %428 = vst.msk [vmem:[%s197] sm:$0x3] %vm427, %v422
      %s429 = smul.u32 2, %s15
      %p430 = scmp.lt.s32.totalorder %s429, 3
      %s431 = scalar_select %p430, %s429, 3
      %s432 = scalar_lea.vmem %s4, %s431
      // Predicated region
      $region37: #{narx_forward.1} parent=35 // pred_check
        %p433 = pneg %p122
      $region38: #{narx_forward.1} parent=35 // pred_check_branch
        %435 = sbr.rel (%p433) target = $region40
      $region39: #{narx_forward.1} parent=35 // pred_region
        %s436 = smul.u32 2, %s15
      $region40: #{narx_forward.1} parent=35 // pred_fallthru
        _
    $region36: #{narx_forward.1} parent=5 // pred_fallthru
      _
    %p437 = scmp.le.s32.totalorder 2, %s10
    // Predicated region
    $region41: #{narx_forward.1} parent=5 // pred_check
      %p438 = pneg %p437
    $region42: #{narx_forward.1} parent=5 // pred_check_branch
      %440 = sbr.rel (%p438) target = $region44
    $region43: #{narx_forward.1} parent=5 // pred_region
      %s441 = ssub.s32 %s10, 2
      // Predicated region
      $region45: #{narx_forward.1} parent=43 // pred_check
        %p442 = pneg %p128
      $region46: #{narx_forward.1} parent=43 // pred_check_branch
        %444 = sbr.rel (%p442) target = $region48
      $region47: #{narx_forward.1} parent=43 // pred_region
        %s445 = smul.u32 2, %s16
        %p446 = scmp.lt.s32.totalorder %s445, 3
        %s447 = scalar_select %p446, %s445, 3
        %s448 = scalar_lea.vmem %s4, %s447
      $region48: #{narx_forward.1} parent=43 // pred_fallthru
        _
    $region44: #{narx_forward.1} parent=5 // pred_fallthru
      _
  $region6: #{narx_forward.1} parent=0 // loop_footer
    %s14 = sadd.s32 1, %s10
  $region7: #{narx_forward.1} parent=0 // loop_footer_branch
    %9 = sbr.rel target = $region3
  $region8: #{narx_forward.1} parent=0 // loop_exit
    _

</llo_original>
